<compile_context>
chip_gen: v7x
topology: tpu7x:2x2x1
jax: 0.10.0
libtpu: 0.0.40
codegen_flags: <defaults>
</compile_context>

<pallas_src>
import functools

import jax
import jax.numpy as jnp
from jax.experimental import pallas as pl
from jax.experimental.pallas import tpu as pltpu


def _coupling_kernel(x_ref, w1_ref, w2_ref, o_ref, *, direct: bool):
    x = x_ref[...]                                    # (tb, fD) lane-dense
    fD = x.shape[-1]

    # Masks are pre-folded into the weights, so the whole body is
    # MXU matmul -> EUP tanh -> MXU matmul -> EUP exp -> VPU fma.
    h = jnp.tanh(jnp.dot(x, w1_ref[...], preferred_element_type=jnp.float32))
    st = jnp.dot(h, w2_ref[...], preferred_element_type=jnp.float32)

    # st = [log_s_folded | t_folded]; in the folded path the split sits on a
    # 128-lane boundary, so these are aligned lane slices.
    log_s = st[:, :fD]
    t = st[:, fD:]

    if direct:
        o_ref[...] = (x * jnp.exp(log_s) + t).astype(o_ref.dtype)
    else:
        o_ref[...] = ((x - t) * jnp.exp(-log_s)).astype(o_ref.dtype)


def _pick_tb(rows: int) -> int:
    """Row-tile size: multiple of 8, <= ~512 rows, >= 2 grid steps if possible."""
    if rows <= 8 or rows % 8 != 0:
        return rows                      # single full-extent block
    cap = min(512, max(8, rows // 2))    # rows // 2 => at least 2 grid steps
    tb = (cap // 8) * 8
    while rows % tb != 0:                # terminates at 8 since rows % 8 == 0
        tb -= 8
    return tb


def coupling_layer(x, w1s, w2s, w1t, w2t, *, mode='direct'):
    """x: (B, D) float32.  Weights pre-transposed: w1*: (D, H), w2*: (H, D)."""
    B, D = x.shape
    H = w1s.shape[1]
    assert w1s.shape == (D, H) and w2s.shape == (H, D)
    assert w1t.shape == (D, H) and w2t.shape == (H, D)
    dt = x.dtype
    itemsize = dt.itemsize

    # Fold the (small) feature dim onto the 128-lane axis when possible.
    if D < 128 and 128 % D == 0 and B % (128 // D) == 0:
        f = 128 // D
    else:
        f = 1
    rows, fD, f2h = B // f, f * D, f * 2 * H
    xf = x.reshape(rows, fD)             # row-major => free metadata reshape

    # Checkerboard masks folded into the weights (kernel never touches them):
    #   (x*mask) @ W1        == x @ (mask[:,None] * W1)
    #   (.. @ W2) * (1-mask) == .. @ (W2 * (1-mask)[None,:])
    mask_d = (jnp.arange(D) % 2).astype(dt)          # (D,)
    inv_d = 1.0 - mask_d
    w1s_m = w1s * mask_d[:, None]
    w1t_m = w1t * mask_d[:, None]
    w2s_m = w2s * inv_d[None, :]
    w2t_m = w2t * inv_d[None, :]

    # Fused, block-diagonal weights.  kron(I_f, .) replicates the per-feature
    # weights across the f folded copies living on the lane axis.
    eye_f = jnp.eye(f, dtype=dt)
    w1_big = jnp.kron(eye_f, jnp.concatenate([w1s_m, w1t_m], axis=1))    # (fD, f2h)
    z = jnp.zeros((H, D), dtype=dt)
    w2_big = jnp.concatenate(
        [jnp.kron(eye_f, jnp.concatenate([w2s_m, z], axis=0)),           # hs -> log_s
         jnp.kron(eye_f, jnp.concatenate([z, w2t_m], axis=0))],          # ht -> t
        axis=1)                                                           # (f2h, 2*fD)

    tb = _pick_tb(rows)
    grid = (rows // tb,)

    # VMEM budget: x + out double-buffered, weights (possibly) double-buffered.
    need = (4 * tb * fD + 2 * (w1_big.size + w2_big.size)) * itemsize
    vmem_limit = int(min(max(2 * need + (4 << 20), 32 << 20), 64 << 20))

    cost = pl.CostEstimate(
        flops=2 * rows * fD * f2h + 2 * rows * f2h * (2 * fD),
        transcendentals=rows * (f2h + fD),
        bytes_accessed=(2 * rows * fD + w1_big.size + w2_big.size) * itemsize)

    kernel = functools.partial(_coupling_kernel, direct=(mode == 'direct'))
    out_f = pl.pallas_call(
        kernel,
        out_shape=jax.ShapeDtypeStruct((rows, fD), dt),
        grid=grid,
        in_specs=[
            pl.BlockSpec((tb, fD), lambda i: (i, 0)),        # x tiles (pipelined)
            pl.BlockSpec((fD, f2h), lambda i: (0, 0)),       # W1 (constant block)
            pl.BlockSpec((f2h, 2 * fD), lambda i: (0, 0)),   # W2 (constant block)
        ],
        out_specs=pl.BlockSpec((tb, fD), lambda i: (i, 0)),
        compiler_params=pltpu.CompilerParams(
            dimension_semantics=("parallel",),
            vmem_limit_bytes=vmem_limit),
        cost_estimate=cost,
    )(xf, w1_big, w2_big)

    return out_f.reshape(B, D)


def coupling_layer_ref(x, w1s, w2s, w1t, w2t, mode='direct'):
    """Pure-JAX reference matching the PyTorch module exactly."""
    D = x.shape[-1]
    mask = (jnp.arange(D) % 2).astype(x.dtype)
    mx = x * mask
    log_s = jnp.tanh(mx @ w1s) @ w2s * (1.0 - mask)
    t = jnp.tanh(mx @ w1t) @ w2t * (1.0 - mask)
    if mode == 'direct':
        return x * jnp.exp(log_s) + t
    return (x - t) * jnp.exp(-log_s)


if __name__ == "__main__":
    key = jax.random.PRNGKey(0)

    def make_params(k, D, H):
        k1, k2, k3, k4 = jax.random.split(k, 4)
        # nn.init.normal_(std=0.1) on nn.Linear weights of shape (out, in);
        # stored pre-transposed as (in, out).
        w1s = (0.1 * jax.random.normal(k1, (H, D), jnp.float32)).T  # (D, H)
        w2s = (0.1 * jax.random.normal(k2, (D, H), jnp.float32)).T  # (H, D)
        w1t = (0.1 * jax.random.normal(k3, (H, D), jnp.float32)).T  # (D, H)
        w2t = (0.1 * jax.random.normal(k4, (D, H), jnp.float32)).T  # (H, D)
        return w1s, w2s, w1t, w2t

    # Case 1: dim_inputs=16, dim_hidden=32, batch sized so the folded
    # lane-dense path runs a 2-step pipelined grid (data stays tiny).
    kx, kp, key = jax.random.split(key, 3)
    B, D, H = 256, 16, 32
    x = jax.random.normal(kx, (B, D), dtype=jnp.float32)
    params = make_params(kp, D, H)

    out = jax.block_until_ready(coupling_layer(x, *params, mode='direct'))
    ref = coupling_layer_ref(x, *params, mode='direct')
    inv = jax.block_until_ready(coupling_layer(out, *params, mode='inverse'))
    assert jnp.allclose(out, ref, atol=2e-5, rtol=2e-5), "direct mismatch (folded)"
    assert jnp.allclose(inv, x, atol=1e-4, rtol=1e-4), "inverse did not invert"

    # Case 2: odd shapes exercising the unfolded fallback (f=1, full-extent blocks).
    kx2, kp2, key = jax.random.split(key, 3)
    B2, D2, H2 = 12, 20, 24
    x2 = jax.random.normal(kx2, (B2, D2), dtype=jnp.float32)
    params2 = make_params(kp2, D2, H2)
    out2 = jax.block_until_ready(coupling_layer(x2, *params2, mode='direct'))
    ref2 = coupling_layer_ref(x2, *params2, mode='direct')
    assert jnp.allclose(out2, ref2, atol=2e-5, rtol=2e-5), "direct mismatch (fallback)"

    print("KERNEL_OK")
</pallas_src>

<mosaic_0001>
module attributes {stable_mosaic.version = 11 : i64} {
  func.func @_coupling_kernel(%arg0: i32, %arg1: memref<16x128xf32, #tpu.memory_space<vmem>>, %arg2: memref<128x512xf32, #tpu.memory_space<vmem>>, %arg3: memref<512x256xf32, #tpu.memory_space<vmem>>, %arg4: memref<16x128xf32, #tpu.memory_space<vmem>>) attributes {dimension_semantics = [#tpu.dimension_semantics<parallel>], iteration_bounds = array<i64: 2>, scalar_prefetch = 0 : i64, scratch_operands = 0 : i64, tpu.core_type = #tpu.core_type<tc>, window_params = [{transform_indices = @transform_0, window_bounds = array<i64: 16, 128>}, {pipeline_mode = #tpu.pipeline_mode<synchronous>, transform_indices = @transform_1, window_bounds = array<i64: 128, 512>}, {pipeline_mode = #tpu.pipeline_mode<synchronous>, transform_indices = @transform_2, window_bounds = array<i64: 512, 256>}, {transform_indices = @transform_3, window_bounds = array<i64: 16, 128>}]} {
    %c0 = arith.constant 0 : index
    %c0_0 = arith.constant 0 : index
    %0 = vector.load %arg1[%c0, %c0_0] : memref<16x128xf32, #tpu.memory_space<vmem>>, vector<16x128xf32>
    %c0_1 = arith.constant 0 : index
    %c0_2 = arith.constant 0 : index
    %1 = vector.load %arg2[%c0_1, %c0_2] : memref<128x512xf32, #tpu.memory_space<vmem>>, vector<128x512xf32>
    %cst = arith.constant dense<0.000000e+00> : vector<16x512xf32>
    %2 = tpu.matmul %0, %1, %cst {dimension_numbers = #tpu.dot_dimension_numbers<[1], [0], [0], [1], [0, 0, 1, 1], [], []>} : vector<16x128xf32>, vector<128x512xf32>, vector<16x512xf32> -> vector<16x512xf32>
    %3 = math.tanh %2 : vector<16x512xf32>
    %c0_3 = arith.constant 0 : index
    %c0_4 = arith.constant 0 : index
    %4 = vector.load %arg3[%c0_3, %c0_4] : memref<512x256xf32, #tpu.memory_space<vmem>>, vector<512x256xf32>
    %cst_5 = arith.constant dense<0.000000e+00> : vector<16x256xf32>
    %5 = tpu.matmul %3, %4, %cst_5 {dimension_numbers = #tpu.dot_dimension_numbers<[1], [0], [0], [1], [0, 0, 1, 1], [], []>} : vector<16x512xf32>, vector<512x256xf32>, vector<16x256xf32> -> vector<16x256xf32>
    %6 = vector.extract_strided_slice %5 {offsets = [0, 0], sizes = [16, 128], strides = [1, 1]} : vector<16x256xf32> to vector<16x128xf32>
    %7 = vector.extract_strided_slice %5 {offsets = [0, 128], sizes = [16, 128], strides = [1, 1]} : vector<16x256xf32> to vector<16x128xf32>
    %8 = math.exp %6 : vector<16x128xf32>
    %9 = arith.mulf %0, %8 : vector<16x128xf32>
    %10 = arith.addf %9, %7 : vector<16x128xf32>
    %c0_6 = arith.constant 0 : index
    %c0_7 = arith.constant 0 : index
    %11 = vector.load %arg4[%c0_6, %c0_7] : memref<16x128xf32, #tpu.memory_space<vmem>>, vector<16x128xf32>
    tpu.vector_store %arg4[%c0_6, %c0_7], %10 {strides = array<i32>} : memref<16x128xf32, #tpu.memory_space<vmem>>, vector<16x128xf32>,
    return
  }
  func.func @transform_0(%arg0: i32) -> (i32, i32) {
    %c0_i32 = arith.constant 0 : i32
    %c0_i32_0 = arith.constant 0 : i32
    return %arg0, %c0_i32 : i32, i32
  }
  func.func @transform_1(%arg0: i32) -> (i32, i32) {
    %c0_i32 = arith.constant 0 : i32
    %c0_i32_0 = arith.constant 0 : i32
    %c0_i32_1 = arith.constant 0 : i32
    return %c0_i32, %c0_i32_0 : i32, i32
  }
  func.func @transform_2(%arg0: i32) -> (i32, i32) {
    %c0_i32 = arith.constant 0 : i32
    %c0_i32_0 = arith.constant 0 : i32
    %c0_i32_1 = arith.constant 0 : i32
    return %c0_i32, %c0_i32_0 : i32, i32
  }
  func.func @transform_3(%arg0: i32) -> (i32, i32) {
    %c0_i32 = arith.constant 0 : i32
    %c0_i32_0 = arith.constant 0 : i32
    return %arg0, %c0_i32 : i32, i32
  }
}

</mosaic_0001>

<llo_original>
// kernel: tpu_custom_call.1
$region0: #{tpu_custom_call.1}
  #allocation0 [shape = 'u32[]', space=smem, size = 0x4, offset = 0x4, fixed_abs, tag = 'smem constant byte address 0x4 - core index']
  #allocation1 [shape = 'u32[144,128]{1,0:T(1,128)}', space=vmem, size = 0x12000, scoped, tag = 'internal scratch']
  %s0 = inlined_call_operand.hbm [shape: f32[32,128], index: 0, kind: input, shape index: {}]
  %s1 = inlined_call_operand.hbm [shape: f32[128,512], index: 1, kind: input, shape index: {}]
  %s2 = inlined_call_operand.hbm [shape: f32[512,256], index: 2, kind: input, shape index: {}]
  %s3 = inlined_call_operand.hbm [shape: f32[32,128], index: 3, kind: output, shape index: {}]
  %s4 = sld [smem:[#allocation0]]
  $region57: #{tpu_custom_call.1} parent=0
    _
  %s6 = ssub.s32 1, %s4
  %s7 = scalar_select 0, %s6, %s4
  $region1: #{tpu_custom_call.1} parent=0
    #allocation2 [shape = 'u8[16384]{0}', space=vmem, size = 0x4000, scoped, tag = 'input window, operand 0']
    #allocation3 [shape = 's32[2]{0}', space=sflag, size = 0x8, scoped, tag = 'scoped memory for tpu_custom_call.1']
    #allocation4 [shape = 's32[2]{0}', space=sflag, size = 0x8, scoped, tag = 'scoped memory for tpu_custom_call.1']
    #allocation5 [shape = 'u8[262144]{0}', space=vmem, size = 0x40000, scoped, tag = 'input window, operand 1, single buffered']
    #allocation6 [shape = 's32[1]{0}', space=sflag, size = 0x4, scoped, tag = 'scoped memory for tpu_custom_call.1']
    #allocation7 [shape = 'u8[524288]{0}', space=vmem, size = 0x80000, scoped, tag = 'input window, operand 2, single buffered']
    #allocation8 [shape = 'u8[16384]{0}', space=vmem, size = 0x4000, scoped, tag = 'output window, operand 0']
    %8 = vsyncpa [#allocation3], 0
    %s9 = scalar_lea.sflag [#allocation3], 1
    %10 = vsyncpa %s9, 0
    %11 = vsyncpa [#allocation6], 0
    %12 = vsyncpa [#allocation4], 0
    %s13 = scalar_lea.sflag [#allocation4], 1
    %14 = vsyncpa %s13, 0
    loop: start=0, step=1, limit=4
    $region2: #{tpu_custom_call.1} parent=1 // loop_pre_header
      _
    $region3: #{tpu_custom_call.1} parent=1 // loop_header
      %s16 = sphi 0, %s20
      %p17 = scmp.ge.s32.totalorder %s16, 4
      %s26 = sphi 0, %s28
      %s29 = sphi 0, %s26
      %s30 = sphi 0, %s29
      %s46 = sphi 0, %s30
      %s50 = sphi 0, %s50
      %s52 = sphi 0, %s50
      %s53 = sphi 0, %s52
      %s67 = sphi 0, %s53
      %s71 = sphi 0, %s71
      %s73 = sphi 0, %s71
      %s74 = sphi 0, %s73
      %s88 = sphi 0, %s74
      %s94 = sphi 0, %s96
      %s97 = sphi 0, %s94
      %s98 = sphi 0, %s97
      %s114 = sphi 0, %s98
    $region4: #{tpu_custom_call.1} parent=1 // loop_header_branch
      %19 = sbr.rel (%p17) target = $region8
    $region5: #{tpu_custom_call.1} parent=1 // loop_body
      %s21 = ssub.s32 %s16, 1
      %s22 = ssub.s32 %s16, 2
      %s23 = sadd.s32 %s16, 1
      %s24 = ssub.s32 %s16, %s23
      %p25 = scmp.eq.s32.totalorder %s24, 0
      %s27 = sadd.s32 %s26, 1
      %s28 = scalar_select %p25, %s26, %s27
      %p31 = pneg %p25
      %p32 = scmp.eq.s32.totalorder %s16, 1
      %p33 = por %p31, %p32
      %p34 = scmp.ne.s32.totalorder %s26, %s29
      %p35 = scmp.eq.s32.totalorder %s16, 0
      %p36 = por %p34, %p35
      %p37 = scmp.ne.s32.totalorder %s26, %s29
      %p38 = scmp.eq.s32.totalorder %s21, 1
      %p39 = por %p37, %p38
      %p40 = scmp.ne.s32.totalorder %s29, %s30
      %p41 = scmp.eq.s32.totalorder %s21, 0
      %p42 = por %p40, %p41
      %p43 = scmp.ne.s32.totalorder %s29, %s30
      %p44 = scmp.eq.s32.totalorder %s22, 1
      %p45 = por %p43, %p44
      %p47 = scmp.ne.s32.totalorder %s30, %s46
      %p48 = scmp.eq.s32.totalorder %s22, 0
      %p49 = por %p47, %p48
      %s51 = sadd.s32 %s50, 1
      %p54 = scmp.eq.s32.totalorder %s16, 1
      %p55 = scmp.ne.s32.totalorder %s50, %s52
      %p56 = scmp.eq.s32.totalorder %s16, 0
      %p57 = por %p55, %p56
      %p58 = scmp.ne.s32.totalorder %s50, %s52
      %p59 = scmp.eq.s32.totalorder %s21, 1
      %p60 = por %p58, %p59
      %p61 = scmp.ne.s32.totalorder %s52, %s53
      %p62 = scmp.eq.s32.totalorder %s21, 0
      %p63 = por %p61, %p62
      %p64 = scmp.ne.s32.totalorder %s52, %s53
      %p65 = scmp.eq.s32.totalorder %s22, 1
      %p66 = por %p64, %p65
      %p68 = scmp.ne.s32.totalorder %s53, %s67
      %p69 = scmp.eq.s32.totalorder %s22, 0
      %p70 = por %p68, %p69
      %s72 = sadd.s32 %s71, 1
      %p75 = scmp.eq.s32.totalorder %s16, 1
      %p76 = scmp.ne.s32.totalorder %s71, %s73
      %p77 = scmp.eq.s32.totalorder %s16, 0
      %p78 = por %p76, %p77
      %p79 = scmp.ne.s32.totalorder %s71, %s73
      %p80 = scmp.eq.s32.totalorder %s21, 1
      %p81 = por %p79, %p80
      %p82 = scmp.ne.s32.totalorder %s73, %s74
      %p83 = scmp.eq.s32.totalorder %s21, 0
      %p84 = por %p82, %p83
      %p85 = scmp.ne.s32.totalorder %s73, %s74
      %p86 = scmp.eq.s32.totalorder %s22, 1
      %p87 = por %p85, %p86
      %p89 = scmp.ne.s32.totalorder %s74, %s88
      %p90 = scmp.eq.s32.totalorder %s22, 0
      %p91 = por %p89, %p90
      %s92 = ssub.s32 %s16, %s23
      %p93 = scmp.eq.s32.totalorder %s92, 0
      %s95 = sadd.s32 %s94, 1
      %s96 = scalar_select %p93, %s94, %s95
      %p99 = pneg %p93
      %p100 = scmp.eq.s32.totalorder %s16, 1
      %p101 = por %p99, %p100
      %p102 = scmp.ne.s32.totalorder %s94, %s97
      %p103 = scmp.eq.s32.totalorder %s16, 0
      %p104 = por %p102, %p103
      %p105 = scmp.ne.s32.totalorder %s94, %s97
      %p106 = scmp.eq.s32.totalorder %s21, 1
      %p107 = por %p105, %p106
      %p108 = scmp.ne.s32.totalorder %s97, %s98
      %p109 = scmp.eq.s32.totalorder %s21, 0
      %p110 = por %p108, %p109
      %p111 = scmp.ne.s32.totalorder %s97, %s98
      %p112 = scmp.eq.s32.totalorder %s22, 1
      %p113 = por %p111, %p112
      %p115 = scmp.ne.s32.totalorder %s98, %s114
      %p116 = scmp.eq.s32.totalorder %s22, 0
      %p117 = por %p115, %p116
      %p118 = scmp.le.s32.totalorder 1, %s16
      %p119 = scmp.lt.s32.totalorder %s16, 3
      %p120 = pnand %p118, %p119
      %p121 = pneg %p120
      // Predicated region
      $region9: #{tpu_custom_call.1} parent=5 // pred_check
        _
      $region10: #{tpu_custom_call.1} parent=5 // pred_check_branch
        %123 = sbr.rel (%p120) target = $region12
      $region11: #{tpu_custom_call.1} parent=5 // pred_region
        %s124 = ssub.s32 %s16, 1
        // Predicated region
        $region13: #{tpu_custom_call.1} parent=11 // pred_check
          %p125 = pneg %p63
        $region14: #{tpu_custom_call.1} parent=11 // pred_check_branch
          %127 = sbr.rel (%p125) target = $region16
        $region15: #{tpu_custom_call.1} parent=11 // pred_region
          %s129 = ssub.s32 8192, 8192
          %130 = vsyncadd [#allocation6], %s129
          %s131 = sshll.u32 [#allocation5], 4
          %s132 = int_to_ptr.vmem [resolvable:$true] %s131
          %137 = dma.hbm_to_vmem [thread:$0]  %s1, 8192, %s132, [#allocation6], 512, 512, 32
        $region16: #{tpu_custom_call.1} parent=11 // pred_fallthru
          _
        // Predicated region
        $region17: #{tpu_custom_call.1} parent=11 // pred_check
          %p138 = pneg %p84
        $region18: #{tpu_custom_call.1} parent=11 // pred_check_branch
          %140 = sbr.rel (%p138) target = $region20
        $region19: #{tpu_custom_call.1} parent=11 // pred_region
          %s142 = ssub.s32 16384, 16384
          %143 = vsyncadd [#allocation6], %s142
          %s144 = sshll.u32 [#allocation7], 4
          %s145 = int_to_ptr.vmem [resolvable:$true] %s144
          %150 = dma.hbm_to_vmem [thread:$0]  %s2, 16384, %s145, [#allocation6], 256, 256, 16
        $region20: #{tpu_custom_call.1} parent=11 // pred_fallthru
          _
      $region12: #{tpu_custom_call.1} parent=5 // pred_fallthru
        _
      %p151 = scmp.lt.s32.totalorder %s16, 2
      // Predicated region
      $region21: #{tpu_custom_call.1} parent=5 // pred_check
        %p152 = pneg %p151
      $region22: #{tpu_custom_call.1} parent=5 // pred_check_branch
        %154 = sbr.rel (%p152) target = $region24
      $region23: #{tpu_custom_call.1} parent=5 // pred_region
        // Predicated region
        $region25: #{tpu_custom_call.1} parent=23 // pred_check
          %p155 = pneg %p36
        $region26: #{tpu_custom_call.1} parent=23 // pred_check_branch
          %157 = sbr.rel (%p155) target = $region28
        $region27: #{tpu_custom_call.1} parent=23 // pred_region
          %s158 = sand.u32 %s26, 1
          %s159 = scalar_lea.sflag [#allocation3], %s158
          %s160 = sand.u32 %s26, 1
          %s161 = smul.addr %s160, 16
          %s162 = scalar_lea.vmem [#allocation2], %s161
          %s163 = smul.u32 2, %s16
          %s165 = ssub.s32 256, 256
          %166 = vsyncadd %s159, %s165
          %s167 = smul.addr %s163, 128
          %s168 = scalar_lea.hbm %s0, %s167
          %s169 = sshll.u32 %s162, 4
          %s170 = int_to_ptr.vmem [resolvable:$true] %s169
          %175 = dma.hbm_to_vmem [thread:$0]  %s168, 256, %s170, %s159, 128, 128, 8
        $region28: #{tpu_custom_call.1} parent=23 // pred_fallthru
          _
      $region24: #{tpu_custom_call.1} parent=5 // pred_fallthru
        _
      %p176 = scmp.le.s32.totalorder 1, %s16
      %p177 = scmp.lt.s32.totalorder %s16, 3
      %p178 = pnand %p176, %p177
      %p179 = pneg %p178
      // Predicated region
      $region29: #{tpu_custom_call.1} parent=5 // pred_check
        _
      $region30: #{tpu_custom_call.1} parent=5 // pred_check_branch
        %181 = sbr.rel (%p178) target = $region32
      $region31: #{tpu_custom_call.1} parent=5 // pred_region
        %s182 = ssub.s32 %s16, 1
        %s183 = sand.u32 %s29, 1
        %s184 = scalar_lea.sflag [#allocation3], %s183
        %s185 = sand.u32 %s29, 1
        %s186 = smul.addr %s185, 16
        %s187 = scalar_lea.vmem [#allocation2], %s186
        // Predicated region
        $region33: #{tpu_custom_call.1} parent=31 // pred_check
          %p188 = pneg %p42
        $region34: #{tpu_custom_call.1} parent=31 // pred_check_branch
          %190 = sbr.rel (%p188) target = $region36
        $region35: #{tpu_custom_call.1} parent=31 // pred_region
          %191 = dma.done %s184, 256
        $region36: #{tpu_custom_call.1} parent=31 // pred_fallthru
          _
        // Predicated region
        $region37: #{tpu_custom_call.1} parent=31 // pred_check
          %p192 = pneg %p63
        $region38: #{tpu_custom_call.1} parent=31 // pred_check_branch
          %194 = sbr.rel (%p192) target = $region40
        $region39: #{tpu_custom_call.1} parent=31 // pred_region
          %195 = dma.done [#allocation6], 8192
        $region40: #{tpu_custom_call.1} parent=31 // pred_fallthru
          _
        // Predicated region
        $region41: #{tpu_custom_call.1} parent=31 // pred_check
          %p196 = pneg %p84
        $region42: #{tpu_custom_call.1} parent=31 // pred_check_branch
          %198 = sbr.rel (%p196) target = $region44
        $region43: #{tpu_custom_call.1} parent=31 // pred_region
          %199 = dma.done [#allocation6], 16384
        $region44: #{tpu_custom_call.1} parent=31 // pred_fallthru
          _
        %s200 = sand.u32 %s29, 1
        %s201 = scalar_lea.sflag [#allocation3], %s200
        %s202 = sand.u32 %s29, 1
        %s203 = smul.addr %s202, 16
        %s204 = scalar_lea.vmem [#allocation2], %s203
        %p205 = pneg %p42
        %p206 = pneg %p39
        %p207 = pneg %p63
        %p208 = pneg %p60
        %p209 = pneg %p84
        %p210 = pneg %p81
        %p211 = pneg %p110
        %p212 = pneg %p107
        %s213 = sand.u32 %s97, 1
        %s214 = scalar_lea.sflag [#allocation4], %s213
        %s215 = sand.u32 %s97, 1
        %s216 = smul.addr %s215, 16
        %s217 = scalar_lea.vmem [#allocation8], %s216
        %s218 = smul.u32 2, %s21
        %s219 = smul.u32 2, %s21
        %v220 = vld [vmem:[%s187] sm:$0xff]
        %v221 = vld [vmem:[%s187 + $0x8] sm:$0xff]
        %v222 = vld [vmem:[#allocation5] sm:$0xff]
        %v223 = vld [vmem:[#allocation5 + $0x8] sm:$0xff]
        %v224 = vld [vmem:[#allocation5 + $0x10] sm:$0xff]
        %v225 = vld [vmem:[#allocation5 + $0x18] sm:$0xff]
        %v226 = vld [vmem:[#allocation5 + $0x20] sm:$0xff]
        %v227 = vld [vmem:[#allocation5 + $0x28] sm:$0xff]
        %v228 = vld [vmem:[#allocation5 + $0x30] sm:$0xff]
        %v229 = vld [vmem:[#allocation5 + $0x38] sm:$0xff]
        %v230 = vld [vmem:[#allocation5 + $0x40] sm:$0xff]
        %v231 = vld [vmem:[#allocation5 + $0x48] sm:$0xff]
        %v232 = vld [vmem:[#allocation5 + $0x50] sm:$0xff]
        %v233 = vld [vmem:[#allocation5 + $0x58] sm:$0xff]
        %v234 = vld [vmem:[#allocation5 + $0x60] sm:$0xff]
        %v235 = vld [vmem:[#allocation5 + $0x68] sm:$0xff]
        %v236 = vld [vmem:[#allocation5 + $0x70] sm:$0xff]
        %v237 = vld [vmem:[#allocation5 + $0x78] sm:$0xff]
        %v238 = vld [vmem:[#allocation5 + $0x80] sm:$0xff]
        %v239 = vld [vmem:[#allocation5 + $0x88] sm:$0xff]
        %v240 = vld [vmem:[#allocation5 + $0x90] sm:$0xff]
        %v241 = vld [vmem:[#allocation5 + $0x98] sm:$0xff]
        %v242 = vld [vmem:[#allocation5 + $0xa0] sm:$0xff]
        %v243 = vld [vmem:[#allocation5 + $0xa8] sm:$0xff]
        %v244 = vld [vmem:[#allocation5 + $0xb0] sm:$0xff]
        %v245 = vld [vmem:[#allocation5 + $0xb8] sm:$0xff]
        %v246 = vld [vmem:[#allocation5 + $0xc0] sm:$0xff]
        %v247 = vld [vmem:[#allocation5 + $0xc8] sm:$0xff]
        %v248 = vld [vmem:[#allocation5 + $0xd0] sm:$0xff]
        %v249 = vld [vmem:[#allocation5 + $0xd8] sm:$0xff]
        %v250 = vld [vmem:[#allocation5 + $0xe0] sm:$0xff]
        %v251 = vld [vmem:[#allocation5 + $0xe8] sm:$0xff]
        %v252 = vld [vmem:[#allocation5 + $0xf0] sm:$0xff]
        %v253 = vld [vmem:[#allocation5 + $0xf8] sm:$0xff]
        %v254 = vld [vmem:[#allocation5 + $0x100] sm:$0xff]
        %v255 = vld [vmem:[#allocation5 + $0x108] sm:$0xff]
        %v256 = vld [vmem:[#allocation5 + $0x110] sm:$0xff]
        %v257 = vld [vmem:[#allocation5 + $0x118] sm:$0xff]
        %v258 = vld [vmem:[#allocation5 + $0x120] sm:$0xff]
        %v259 = vld [vmem:[#allocation5 + $0x128] sm:$0xff]
        %v260 = vld [vmem:[#allocation5 + $0x130] sm:$0xff]
        %v261 = vld [vmem:[#allocation5 + $0x138] sm:$0xff]
        %v262 = vld [vmem:[#allocation5 + $0x140] sm:$0xff]
        %v263 = vld [vmem:[#allocation5 + $0x148] sm:$0xff]
        %v264 = vld [vmem:[#allocation5 + $0x150] sm:$0xff]
        %v265 = vld [vmem:[#allocation5 + $0x158] sm:$0xff]
        %v266 = vld [vmem:[#allocation5 + $0x160] sm:$0xff]
        %v267 = vld [vmem:[#allocation5 + $0x168] sm:$0xff]
        %v268 = vld [vmem:[#allocation5 + $0x170] sm:$0xff]
        %v269 = vld [vmem:[#allocation5 + $0x178] sm:$0xff]
        %v270 = vld [vmem:[#allocation5 + $0x180] sm:$0xff]
        %v271 = vld [vmem:[#allocation5 + $0x188] sm:$0xff]
        %v272 = vld [vmem:[#allocation5 + $0x190] sm:$0xff]
        %v273 = vld [vmem:[#allocation5 + $0x198] sm:$0xff]
        %v274 = vld [vmem:[#allocation5 + $0x1a0] sm:$0xff]
        %v275 = vld [vmem:[#allocation5 + $0x1a8] sm:$0xff]
        %v276 = vld [vmem:[#allocation5 + $0x1b0] sm:$0xff]
        %v277 = vld [vmem:[#allocation5 + $0x1b8] sm:$0xff]
        %v278 = vld [vmem:[#allocation5 + $0x1c0] sm:$0xff]
        %v279 = vld [vmem:[#allocation5 + $0x1c8] sm:$0xff]
        %v280 = vld [vmem:[#allocation5 + $0x1d0] sm:$0xff]
        %v281 = vld [vmem:[#allocation5 + $0x1d8] sm:$0xff]
        %v282 = vld [vmem:[#allocation5 + $0x1e0] sm:$0xff]
        %v283 = vld [vmem:[#allocation5 + $0x1e8] sm:$0xff]
        %v284 = vld [vmem:[#allocation5 + $0x1f0] sm:$0xff]
        %v285 = vld [vmem:[#allocation5 + $0x1f8] sm:$0xff]
        %286 = vmatprep.subr.mxu0 %v223
        %287 = vmatpush1.msra.mxu0 %v222
        %288 = vmatprep.subr.mxu0 %v227
        %289 = vmatpush1.msra.mxu0 %v226
        %290 = vmatprep.subr.mxu0 %v231
        %291 = vmatpush1.msra.mxu0 %v230
        %292 = vmatprep.subr.mxu0 %v235
        %293 = vmatpush1.msra.mxu0 %v234
        %294 = vmatprep.subr.mxu0 %v239
        %295 = vmatpush1.msra.mxu0 %v238
        %296 = vmatprep.subr.mxu0 %v243
        %297 = vmatpush1.msra.mxu0 %v242
        %298 = vmatprep.subr.mxu0 %v247
        %299 = vmatpush1.msra.mxu0 %v246
        %300 = vmatprep.subr.mxu0 %v251
        %301 = vmatpush1.msra.mxu0 %v250
        %302 = vmatprep.subr.mxu0 %v255
        %303 = vmatpush1.msra.mxu0 %v254
        %304 = vmatprep.subr.mxu0 %v259
        %305 = vmatpush1.msra.mxu0 %v258
        %306 = vmatprep.subr.mxu0 %v263
        %307 = vmatpush1.msra.mxu0 %v262
        %308 = vmatprep.subr.mxu0 %v267
        %309 = vmatpush1.msra.mxu0 %v266
        %310 = vmatprep.subr.mxu0 %v271
        %311 = vmatpush1.msra.mxu0 %v270
        %312 = vmatprep.subr.mxu0 %v275
        %313 = vmatpush1.msra.mxu0 %v274
        %314 = vmatprep.subr.mxu0 %v279
        %315 = vmatpush1.msra.mxu0 %v278
        %316 = vmatprep.subr.mxu0 %v283
        %317 = vmatpush1.msra.mxu0 %v282
        %318 = vmatprep.subr.mxu0 0.0
        %319 = vmatpush1.msra.mxu0 0.0
        %320 = vmatprep.subr.mxu0 0.0
        %321 = vmatpush1.msra.mxu0 0.0
        %322 = vmatprep.subr.mxu0 0.0
        %323 = vmatpush1.msra.mxu0 0.0
        %324 = vmatprep.subr.mxu0 0.0
        %325 = vmatpush1.msra.mxu0 0.0
        %326 = vmatprep.subr.mxu0 0.0
        %327 = vmatpush1.msra.mxu0 0.0
        %328 = vmatprep.subr.mxu0 0.0
        %329 = vmatpush1.msra.mxu0 0.0
        %330 = vmatprep.subr.mxu0 0.0
        %331 = vmatpush1.msra.mxu0 0.0
        %332 = vmatprep.subr.mxu0 0.0
        %333 = vmatpush1.msra.mxu0 0.0
        %334 = vmatprep.subr.mxu0 0.0
        %335 = vmatpush1.msra.mxu0 0.0
        %336 = vmatprep.subr.mxu0 0.0
        %337 = vmatpush1.msra.mxu0 0.0
        %338 = vmatprep.subr.mxu0 0.0
        %339 = vmatpush1.msra.mxu0 0.0
        %340 = vmatprep.subr.mxu0 0.0
        %341 = vmatpush1.msra.mxu0 0.0
        %342 = vmatprep.subr.mxu0 0.0
        %343 = vmatpush1.msra.mxu0 0.0
        %344 = vmatprep.subr.mxu0 0.0
        %345 = vmatpush1.msra.mxu0 0.0
        %346 = vmatprep.subr.mxu0 0.0
        %347 = vmatpush1.msra.mxu0 0.0
        %348 = vmatprep.subr.mxu0 0.0
        %349 = vmatpush1.msra.mxu0 0.0
        %350 = vmatprep.mubr.f32.mxu0 0.0
        %351 = vmatmul.mubr.f32.gmra.mrb[0].mxu0 %v220
        %v352 = vpop.f32.mrb[0].mxu0
        %v353 = vadd.f32 0.0, %v352
        %v354 = vpop.f32.mrb[0].mxu0
        %v355 = vadd.f32 0.0, %v354
        %356 = vmatprep.mubr.f32.mxu0 0.0
        %357 = vmatmul.mubr.f32.gmra.mrb[0].mxu0 %v221
        %v358 = vpop.f32.mrb[0].mxu0
        %v359 = vadd.f32 0.0, %v358
        %v360 = vpop.f32.mrb[0].mxu0
        %v361 = vadd.f32 0.0, %v360
        %362 = vdwg.mxu0
        %363 = vmatprep.subr.mxu0 %v225
        %364 = vmatpush1.msra.mxu0 %v224
        %365 = vmatprep.subr.mxu0 %v229
        %366 = vmatpush1.msra.mxu0 %v228
        %367 = vmatprep.subr.mxu0 %v233
        %368 = vmatpush1.msra.mxu0 %v232
        %369 = vmatprep.subr.mxu0 %v237
        %370 = vmatpush1.msra.mxu0 %v236
        %371 = vmatprep.subr.mxu0 %v241
        %372 = vmatpush1.msra.mxu0 %v240
        %373 = vmatprep.subr.mxu0 %v245
        %374 = vmatpush1.msra.mxu0 %v244
        %375 = vmatprep.subr.mxu0 %v249
        %376 = vmatpush1.msra.mxu0 %v248
        %377 = vmatprep.subr.mxu0 %v253
        %378 = vmatpush1.msra.mxu0 %v252
        %379 = vmatprep.subr.mxu0 %v257
        %380 = vmatpush1.msra.mxu0 %v256
        %381 = vmatprep.subr.mxu0 %v261
        %382 = vmatpush1.msra.mxu0 %v260
        %383 = vmatprep.subr.mxu0 %v265
        %384 = vmatpush1.msra.mxu0 %v264
        %385 = vmatprep.subr.mxu0 %v269
        %386 = vmatpush1.msra.mxu0 %v268
        %387 = vmatprep.subr.mxu0 %v273
        %388 = vmatpush1.msra.mxu0 %v272
        %389 = vmatprep.subr.mxu0 %v277
        %390 = vmatpush1.msra.mxu0 %v276
        %391 = vmatprep.subr.mxu0 %v281
        %392 = vmatpush1.msra.mxu0 %v280
        %393 = vmatprep.subr.mxu0 %v285
        %394 = vmatpush1.msra.mxu0 %v284
        %395 = vmatprep.subr.mxu0 0.0
        %396 = vmatpush1.msra.mxu0 0.0
        %397 = vmatprep.subr.mxu0 0.0
        %398 = vmatpush1.msra.mxu0 0.0
        %399 = vmatprep.subr.mxu0 0.0
        %400 = vmatpush1.msra.mxu0 0.0
        %401 = vmatprep.subr.mxu0 0.0
        %402 = vmatpush1.msra.mxu0 0.0
        %403 = vmatprep.subr.mxu0 0.0
        %404 = vmatpush1.msra.mxu0 0.0
        %405 = vmatprep.subr.mxu0 0.0
        %406 = vmatpush1.msra.mxu0 0.0
        %407 = vmatprep.subr.mxu0 0.0
        %408 = vmatpush1.msra.mxu0 0.0
        %409 = vmatprep.subr.mxu0 0.0
        %410 = vmatpush1.msra.mxu0 0.0
        %411 = vmatprep.subr.mxu0 0.0
        %412 = vmatpush1.msra.mxu0 0.0
        %413 = vmatprep.subr.mxu0 0.0
        %414 = vmatpush1.msra.mxu0 0.0
        %415 = vmatprep.subr.mxu0 0.0
        %416 = vmatpush1.msra.mxu0 0.0
        %417 = vmatprep.subr.mxu0 0.0
        %418 = vmatpush1.msra.mxu0 0.0
        %419 = vmatprep.subr.mxu0 0.0
        %420 = vmatpush1.msra.mxu0 0.0
        %421 = vmatprep.subr.mxu0 0.0
        %422 = vmatpush1.msra.mxu0 0.0
        %423 = vmatprep.subr.mxu0 0.0
        %424 = vmatpush1.msra.mxu0 0.0
        %425 = vmatprep.subr.mxu0 0.0
        %426 = vmatpush1.msra.mxu0 0.0
        %427 = vmatprep.mubr.f32.mxu0 0.0
        %428 = vmatmul.mubr.f32.gmra.mrb[0].mxu0 %v220
        %v429 = vpop.f32.mrb[0].mxu0
        %v430 = vadd.f32 0.0, %v429
        %v431 = vpop.f32.mrb[0].mxu0
        %v432 = vadd.f32 0.0, %v431
        %433 = vmatprep.mubr.f32.mxu0 0.0
        %434 = vmatmul.mubr.f32.gmra.mrb[0].mxu0 %v221
        %v435 = vpop.f32.mrb[0].mxu0
        %v436 = vadd.f32 0.0, %v435
        %v437 = vpop.f32.mrb[0].mxu0
        %v438 = vadd.f32 0.0, %v437
        %439 = vdwg.mxu0
        %v440 = vtanh.pop %v353
        %v441 = vtanh.pop %v355
        %v442 = vtanh.pop %v430
        %v443 = vtanh.pop %v432
        %v444 = vtanh.pop %v359
        %v445 = vtanh.pop %v361
        %v446 = vtanh.pop %v436
        %v447 = vtanh.pop %v438
        %v448 = vld [vmem:[#allocation7] sm:$0xff]
        %v449 = vld [vmem:[#allocation7 + $0x8] sm:$0xff]
        %v450 = vld [vmem:[#allocation7 + $0x10] sm:$0xff]
        %v451 = vld [vmem:[#allocation7 + $0x18] sm:$0xff]
        %v452 = vld [vmem:[#allocation7 + $0x20] sm:$0xff]
        %v453 = vld [vmem:[#allocation7 + $0x28] sm:$0xff]
        %v454 = vld [vmem:[#allocation7 + $0x30] sm:$0xff]
        %v455 = vld [vmem:[#allocation7 + $0x38] sm:$0xff]
        %v456 = vld [vmem:[#allocation7 + $0x40] sm:$0xff]
        %v457 = vld [vmem:[#allocation7 + $0x48] sm:$0xff]
        %v458 = vld [vmem:[#allocation7 + $0x50] sm:$0xff]
        %v459 = vld [vmem:[#allocation7 + $0x58] sm:$0xff]
        %v460 = vld [vmem:[#allocation7 + $0x60] sm:$0xff]
        %v461 = vld [vmem:[#allocation7 + $0x68] sm:$0xff]
        %v462 = vld [vmem:[#allocation7 + $0x70] sm:$0xff]
        %v463 = vld [vmem:[#allocation7 + $0x78] sm:$0xff]
        %v464 = vld [vmem:[#allocation7 + $0x80] sm:$0xff]
        %v465 = vld [vmem:[#allocation7 + $0x88] sm:$0xff]
        %v466 = vld [vmem:[#allocation7 + $0x90] sm:$0xff]
        %v467 = vld [vmem:[#allocation7 + $0x98] sm:$0xff]
        %v468 = vld [vmem:[#allocation7 + $0xa0] sm:$0xff]
        %v469 = vld [vmem:[#allocation7 + $0xa8] sm:$0xff]
        %v470 = vld [vmem:[#allocation7 + $0xb0] sm:$0xff]
        %v471 = vld [vmem:[#allocation7 + $0xb8] sm:$0xff]
        %v472 = vld [vmem:[#allocation7 + $0xc0] sm:$0xff]
        %v473 = vld [vmem:[#allocation7 + $0xc8] sm:$0xff]
        %v474 = vld [vmem:[#allocation7 + $0xd0] sm:$0xff]
        %v475 = vld [vmem:[#allocation7 + $0xd8] sm:$0xff]
        %v476 = vld [vmem:[#allocation7 + $0xe0] sm:$0xff]
        %v477 = vld [vmem:[#allocation7 + $0xe8] sm:$0xff]
        %v478 = vld [vmem:[#allocation7 + $0xf0] sm:$0xff]
        %v479 = vld [vmem:[#allocation7 + $0xf8] sm:$0xff]
        %v480 = vld [vmem:[#allocation7 + $0x100] sm:$0xff]
        %v481 = vld [vmem:[#allocation7 + $0x108] sm:$0xff]
        %v482 = vld [vmem:[#allocation7 + $0x110] sm:$0xff]
        %v483 = vld [vmem:[#allocation7 + $0x118] sm:$0xff]
        %v484 = vld [vmem:[#allocation7 + $0x120] sm:$0xff]
        %v485 = vld [vmem:[#allocation7 + $0x128] sm:$0xff]
        %v486 = vld [vmem:[#allocation7 + $0x130] sm:$0xff]
        %v487 = vld [vmem:[#allocation7 + $0x138] sm:$0xff]
        %v488 = vld [vmem:[#allocation7 + $0x140] sm:$0xff]
        %v489 = vld [vmem:[#allocation7 + $0x148] sm:$0xff]
        %v490 = vld [vmem:[#allocation7 + $0x150] sm:$0xff]
        %v491 = vld [vmem:[#allocation7 + $0x158] sm:$0xff]
        %v492 = vld [vmem:[#allocation7 + $0x160] sm:$0xff]
        %v493 = vld [vmem:[#allocation7 + $0x168] sm:$0xff]
        %v494 = vld [vmem:[#allocation7 + $0x170] sm:$0xff]
        %v495 = vld [vmem:[#allocation7 + $0x178] sm:$0xff]
        %v496 = vld [vmem:[#allocation7 + $0x180] sm:$0xff]
        %v497 = vld [vmem:[#allocation7 + $0x188] sm:$0xff]
        %v498 = vld [vmem:[#allocation7 + $0x190] sm:$0xff]
        %v499 = vld [vmem:[#allocation7 + $0x198] sm:$0xff]
        %v500 = vld [vmem:[#allocation7 + $0x1a0] sm:$0xff]
        %v501 = vld [vmem:[#allocation7 + $0x1a8] sm:$0xff]
        %v502 = vld [vmem:[#allocation7 + $0x1b0] sm:$0xff]
        %v503 = vld [vmem:[#allocation7 + $0x1b8] sm:$0xff]
        %v504 = vld [vmem:[#allocation7 + $0x1c0] sm:$0xff]
        %v505 = vld [vmem:[#allocation7 + $0x1c8] sm:$0xff]
        %v506 = vld [vmem:[#allocation7 + $0x1d0] sm:$0xff]
        %v507 = vld [vmem:[#allocation7 + $0x1d8] sm:$0xff]
        %v508 = vld [vmem:[#allocation7 + $0x1e0] sm:$0xff]
        %v509 = vld [vmem:[#allocation7 + $0x1e8] sm:$0xff]
        %v510 = vld [vmem:[#allocation7 + $0x1f0] sm:$0xff]
        %v511 = vld [vmem:[#allocation7 + $0x1f8] sm:$0xff]
        %v512 = vld [vmem:[#allocation7 + $0x200] sm:$0xff]
        %v513 = vld [vmem:[#allocation7 + $0x208] sm:$0xff]
        %v514 = vld [vmem:[#allocation7 + $0x210] sm:$0xff]
        %v515 = vld [vmem:[#allocation7 + $0x218] sm:$0xff]
        %v516 = vld [vmem:[#allocation7 + $0x220] sm:$0xff]
        %v517 = vld [vmem:[#allocation7 + $0x228] sm:$0xff]
        %v518 = vld [vmem:[#allocation7 + $0x230] sm:$0xff]
        %v519 = vld [vmem:[#allocation7 + $0x238] sm:$0xff]
        %v520 = vld [vmem:[#allocation7 + $0x240] sm:$0xff]
        %v521 = vld [vmem:[#allocation7 + $0x248] sm:$0xff]
        %v522 = vld [vmem:[#allocation7 + $0x250] sm:$0xff]
        %v523 = vld [vmem:[#allocation7 + $0x258] sm:$0xff]
        %v524 = vld [vmem:[#allocation7 + $0x260] sm:$0xff]
        %v525 = vld [vmem:[#allocation7 + $0x268] sm:$0xff]
        %v526 = vld [vmem:[#allocation7 + $0x270] sm:$0xff]
        %v527 = vld [vmem:[#allocation7 + $0x278] sm:$0xff]
        %v528 = vld [vmem:[#allocation7 + $0x280] sm:$0xff]
        %v529 = vld [vmem:[#allocation7 + $0x288] sm:$0xff]
        %v530 = vld [vmem:[#allocation7 + $0x290] sm:$0xff]
        %v531 = vld [vmem:[#allocation7 + $0x298] sm:$0xff]
        %v532 = vld [vmem:[#allocation7 + $0x2a0] sm:$0xff]
        %v533 = vld [vmem:[#allocation7 + $0x2a8] sm:$0xff]
        %v534 = vld [vmem:[#allocation7 + $0x2b0] sm:$0xff]
        %v535 = vld [vmem:[#allocation7 + $0x2b8] sm:$0xff]
        %v536 = vld [vmem:[#allocation7 + $0x2c0] sm:$0xff]
        %v537 = vld [vmem:[#allocation7 + $0x2c8] sm:$0xff]
        %v538 = vld [vmem:[#allocation7 + $0x2d0] sm:$0xff]
        %v539 = vld [vmem:[#allocation7 + $0x2d8] sm:$0xff]
        %v540 = vld [vmem:[#allocation7 + $0x2e0] sm:$0xff]
        %v541 = vld [vmem:[#allocation7 + $0x2e8] sm:$0xff]
        %v542 = vld [vmem:[#allocation7 + $0x2f0] sm:$0xff]
        %v543 = vld [vmem:[#allocation7 + $0x2f8] sm:$0xff]
        %v544 = vld [vmem:[#allocation7 + $0x300] sm:$0xff]
        %v545 = vld [vmem:[#allocation7 + $0x308] sm:$0xff]
        %v546 = vld [vmem:[#allocation7 + $0x310] sm:$0xff]
        %v547 = vld [vmem:[#allocation7 + $0x318] sm:$0xff]
        %v548 = vld [vmem:[#allocation7 + $0x320] sm:$0xff]
        %v549 = vld [vmem:[#allocation7 + $0x328] sm:$0xff]
        %v550 = vld [vmem:[#allocation7 + $0x330] sm:$0xff]
        %v551 = vld [vmem:[#allocation7 + $0x338] sm:$0xff]
        %v552 = vld [vmem:[#allocation7 + $0x340] sm:$0xff]
        %v553 = vld [vmem:[#allocation7 + $0x348] sm:$0xff]
        %v554 = vld [vmem:[#allocation7 + $0x350] sm:$0xff]
        %v555 = vld [vmem:[#allocation7 + $0x358] sm:$0xff]
        %v556 = vld [vmem:[#allocation7 + $0x360] sm:$0xff]
        %v557 = vld [vmem:[#allocation7 + $0x368] sm:$0xff]
        %v558 = vld [vmem:[#allocation7 + $0x370] sm:$0xff]
        %v559 = vld [vmem:[#allocation7 + $0x378] sm:$0xff]
        %v560 = vld [vmem:[#allocation7 + $0x380] sm:$0xff]
        %v561 = vld [vmem:[#allocation7 + $0x388] sm:$0xff]
        %v562 = vld [vmem:[#allocation7 + $0x390] sm:$0xff]
        %v563 = vld [vmem:[#allocation7 + $0x398] sm:$0xff]
        %v564 = vld [vmem:[#allocation7 + $0x3a0] sm:$0xff]
        %v565 = vld [vmem:[#allocation7 + $0x3a8] sm:$0xff]
        %v566 = vld [vmem:[#allocation7 + $0x3b0] sm:$0xff]
        %v567 = vld [vmem:[#allocation7 + $0x3b8] sm:$0xff]
        %v568 = vld [vmem:[#allocation7 + $0x3c0] sm:$0xff]
        %v569 = vld [vmem:[#allocation7 + $0x3c8] sm:$0xff]
        %v570 = vld [vmem:[#allocation7 + $0x3d0] sm:$0xff]
        %v571 = vld [vmem:[#allocation7 + $0x3d8] sm:$0xff]
        %v572 = vld [vmem:[#allocation7 + $0x3e0] sm:$0xff]
        %v573 = vld [vmem:[#allocation7 + $0x3e8] sm:$0xff]
        %v574 = vld [vmem:[#allocation7 + $0x3f0] sm:$0xff]
        %v575 = vld [vmem:[#allocation7 + $0x3f8] sm:$0xff]
        %576 = vmatprep.subr.mxu0 %v449
        %577 = vmatpush1.msra.mxu0 %v448
        %578 = vmatprep.subr.mxu0 %v451
        %579 = vmatpush1.msra.mxu0 %v450
        %580 = vmatprep.subr.mxu0 %v453
        %581 = vmatpush1.msra.mxu0 %v452
        %582 = vmatprep.subr.mxu0 %v455
        %583 = vmatpush1.msra.mxu0 %v454
        %584 = vmatprep.subr.mxu0 %v457
        %585 = vmatpush1.msra.mxu0 %v456
        %586 = vmatprep.subr.mxu0 %v459
        %587 = vmatpush1.msra.mxu0 %v458
        %588 = vmatprep.subr.mxu0 %v461
        %589 = vmatpush1.msra.mxu0 %v460
        %590 = vmatprep.subr.mxu0 %v463
        %591 = vmatpush1.msra.mxu0 %v462
        %592 = vmatprep.subr.mxu0 %v465
        %593 = vmatpush1.msra.mxu0 %v464
        %594 = vmatprep.subr.mxu0 %v467
        %595 = vmatpush1.msra.mxu0 %v466
        %596 = vmatprep.subr.mxu0 %v469
        %597 = vmatpush1.msra.mxu0 %v468
        %598 = vmatprep.subr.mxu0 %v471
        %599 = vmatpush1.msra.mxu0 %v470
        %600 = vmatprep.subr.mxu0 %v473
        %601 = vmatpush1.msra.mxu0 %v472
        %602 = vmatprep.subr.mxu0 %v475
        %603 = vmatpush1.msra.mxu0 %v474
        %604 = vmatprep.subr.mxu0 %v477
        %605 = vmatpush1.msra.mxu0 %v476
        %606 = vmatprep.subr.mxu0 %v479
        %607 = vmatpush1.msra.mxu0 %v478
        %608 = vmatprep.subr.mxu0 %v481
        %609 = vmatpush1.msra.mxu0 %v480
        %610 = vmatprep.subr.mxu0 %v483
        %611 = vmatpush1.msra.mxu0 %v482
        %612 = vmatprep.subr.mxu0 %v485
        %613 = vmatpush1.msra.mxu0 %v484
        %614 = vmatprep.subr.mxu0 %v487
        %615 = vmatpush1.msra.mxu0 %v486
        %616 = vmatprep.subr.mxu0 %v489
        %617 = vmatpush1.msra.mxu0 %v488
        %618 = vmatprep.subr.mxu0 %v491
        %619 = vmatpush1.msra.mxu0 %v490
        %620 = vmatprep.subr.mxu0 %v493
        %621 = vmatpush1.msra.mxu0 %v492
        %622 = vmatprep.subr.mxu0 %v495
        %623 = vmatpush1.msra.mxu0 %v494
        %624 = vmatprep.subr.mxu0 %v497
        %625 = vmatpush1.msra.mxu0 %v496
        %626 = vmatprep.subr.mxu0 %v499
        %627 = vmatpush1.msra.mxu0 %v498
        %628 = vmatprep.subr.mxu0 %v501
        %629 = vmatpush1.msra.mxu0 %v500
        %630 = vmatprep.subr.mxu0 %v503
        %631 = vmatpush1.msra.mxu0 %v502
        %632 = vmatprep.subr.mxu0 %v505
        %633 = vmatpush1.msra.mxu0 %v504
        %634 = vmatprep.subr.mxu0 %v507
        %635 = vmatpush1.msra.mxu0 %v506
        %636 = vmatprep.subr.mxu0 %v509
        %637 = vmatpush1.msra.mxu0 %v508
        %638 = vmatprep.subr.mxu0 %v511
        %639 = vmatpush1.msra.mxu0 %v510
        %640 = vmatprep.mubr.f32.mxu0 %v441
        %641 = vmatmul.mubr.f32.gmra.mrb[0].mxu0 %v440
        %v642 = vpop.f32.mrb[0].mxu0
        %v643 = vadd.f32 0.0, %v642
        %v644 = vpop.f32.mrb[0].mxu0
        %v645 = vadd.f32 0.0, %v644
        %646 = vmatprep.mubr.f32.mxu0 %v445
        %647 = vmatmul.mubr.f32.gmra.mrb[0].mxu0 %v444
        %v648 = vpop.f32.mrb[0].mxu0
        %v649 = vadd.f32 0.0, %v648
        %v650 = vpop.f32.mrb[0].mxu0
        %v651 = vadd.f32 0.0, %v650
        %652 = vdwg.mxu0
        %653 = vmatprep.subr.mxu0 %v513
        %654 = vmatpush1.msra.mxu0 %v512
        %655 = vmatprep.subr.mxu0 %v515
        %656 = vmatpush1.msra.mxu0 %v514
        %657 = vmatprep.subr.mxu0 %v517
        %658 = vmatpush1.msra.mxu0 %v516
        %659 = vmatprep.subr.mxu0 %v519
        %660 = vmatpush1.msra.mxu0 %v518
        %661 = vmatprep.subr.mxu0 %v521
        %662 = vmatpush1.msra.mxu0 %v520
        %663 = vmatprep.subr.mxu0 %v523
        %664 = vmatpush1.msra.mxu0 %v522
        %665 = vmatprep.subr.mxu0 %v525
        %666 = vmatpush1.msra.mxu0 %v524
        %667 = vmatprep.subr.mxu0 %v527
        %668 = vmatpush1.msra.mxu0 %v526
        %669 = vmatprep.subr.mxu0 %v529
        %670 = vmatpush1.msra.mxu0 %v528
        %671 = vmatprep.subr.mxu0 %v531
        %672 = vmatpush1.msra.mxu0 %v530
        %673 = vmatprep.subr.mxu0 %v533
        %674 = vmatpush1.msra.mxu0 %v532
        %675 = vmatprep.subr.mxu0 %v535
        %676 = vmatpush1.msra.mxu0 %v534
        %677 = vmatprep.subr.mxu0 %v537
        %678 = vmatpush1.msra.mxu0 %v536
        %679 = vmatprep.subr.mxu0 %v539
        %680 = vmatpush1.msra.mxu0 %v538
        %681 = vmatprep.subr.mxu0 %v541
        %682 = vmatpush1.msra.mxu0 %v540
        %683 = vmatprep.subr.mxu0 %v543
        %684 = vmatpush1.msra.mxu0 %v542
        %685 = vmatprep.subr.mxu0 %v545
        %686 = vmatpush1.msra.mxu0 %v544
        %687 = vmatprep.subr.mxu0 %v547
        %688 = vmatpush1.msra.mxu0 %v546
        %689 = vmatprep.subr.mxu0 %v549
        %690 = vmatpush1.msra.mxu0 %v548
        %691 = vmatprep.subr.mxu0 %v551
        %692 = vmatpush1.msra.mxu0 %v550
        %693 = vmatprep.subr.mxu0 %v553
        %694 = vmatpush1.msra.mxu0 %v552
        %695 = vmatprep.subr.mxu0 %v555
        %696 = vmatpush1.msra.mxu0 %v554
        %697 = vmatprep.subr.mxu0 %v557
        %698 = vmatpush1.msra.mxu0 %v556
        %699 = vmatprep.subr.mxu0 %v559
        %700 = vmatpush1.msra.mxu0 %v558
        %701 = vmatprep.subr.mxu0 %v561
        %702 = vmatpush1.msra.mxu0 %v560
        %703 = vmatprep.subr.mxu0 %v563
        %704 = vmatpush1.msra.mxu0 %v562
        %705 = vmatprep.subr.mxu0 %v565
        %706 = vmatpush1.msra.mxu0 %v564
        %707 = vmatprep.subr.mxu0 %v567
        %708 = vmatpush1.msra.mxu0 %v566
        %709 = vmatprep.subr.mxu0 %v569
        %710 = vmatpush1.msra.mxu0 %v568
        %711 = vmatprep.subr.mxu0 %v571
        %712 = vmatpush1.msra.mxu0 %v570
        %713 = vmatprep.subr.mxu0 %v573
        %714 = vmatpush1.msra.mxu0 %v572
        %715 = vmatprep.subr.mxu0 %v575
        %716 = vmatpush1.msra.mxu0 %v574
        %717 = vmatprep.mubr.f32.mxu0 %v443
        %718 = vmatmul.mubr.f32.gmra.mrb[0].mxu0 %v442
        %v719 = vpop.f32.mrb[0].mxu0
        %v720 = vadd.f32 %v643, %v719
        %v721 = vpop.f32.mrb[0].mxu0
        %v722 = vadd.f32 %v645, %v721
        %723 = vmatprep.mubr.f32.mxu0 %v447
        %724 = vmatmul.mubr.f32.gmra.mrb[0].mxu0 %v446
        %v725 = vpop.f32.mrb[0].mxu0
        %v726 = vadd.f32 %v649, %v725
        %v727 = vpop.f32.mrb[0].mxu0
        %v728 = vadd.f32 %v651, %v727
        %729 = vdwg.mxu0
        %v730 = vmul.f32 %v720, 1.442695
        %v731 = vpow.pop %v730
        %v732 = vmul.f32 %v726, 1.442695
        %v733 = vpow.pop %v732
        %v734 = vmul.f32 %v220, %v731
        %v735 = vmul.f32 %v221, %v733
        %v736 = vadd.f32 %v734, %v722
        %v737 = vadd.f32 %v735, %v728
        %738 = vst [vmem:[%s217] sm:$0xff] %v736
        %739 = vst [vmem:[%s217 + $0x8] sm:$0xff] %v737
        %s740 = sand.u32 %s97, 1
        %s741 = scalar_lea.sflag [#allocation4], %s740
        %s742 = sand.u32 %s97, 1
        %s743 = smul.addr %s742, 16
        %s744 = scalar_lea.vmem [#allocation8], %s743
        // Predicated region
        $region45: #{tpu_custom_call.1} parent=31 // pred_check
          %p745 = pneg %p107
        $region46: #{tpu_custom_call.1} parent=31 // pred_check_branch
          %747 = sbr.rel (%p745) target = $region48
        $region47: #{tpu_custom_call.1} parent=31 // pred_region
          %s748 = smul.u32 2, %s21
          %s750 = ssub.s32 256, 256
          %751 = vsyncadd %s741, %s750
          %s752 = smul.addr %s748, 128
          %s753 = scalar_lea.hbm %s3, %s752
          %s754 = sshll.u32 %s744, 4
          %s755 = int_to_ptr.vmem [resolvable:$true] %s754
          %760 = dma.vmem_to_hbm [thread:$0]  %s755, 256, %s753, %s741, 128, 128, 8
        $region48: #{tpu_custom_call.1} parent=31 // pred_fallthru
          _
      $region32: #{tpu_custom_call.1} parent=5 // pred_fallthru
        _
      %p761 = scmp.le.s32.totalorder 2, %s16
      // Predicated region
      $region49: #{tpu_custom_call.1} parent=5 // pred_check
        %p762 = pneg %p761
      $region50: #{tpu_custom_call.1} parent=5 // pred_check_branch
        %764 = sbr.rel (%p762) target = $region52
      $region51: #{tpu_custom_call.1} parent=5 // pred_region
        %s765 = ssub.s32 %s16, 2
        // Predicated region
        $region53: #{tpu_custom_call.1} parent=51 // pred_check
          %p766 = pneg %p113
        $region54: #{tpu_custom_call.1} parent=51 // pred_check_branch
          %768 = sbr.rel (%p766) target = $region56
        $region55: #{tpu_custom_call.1} parent=51 // pred_region
          %s769 = sand.u32 %s98, 1
          %s770 = scalar_lea.sflag [#allocation4], %s769
          %s771 = sand.u32 %s98, 1
          %s772 = smul.addr %s771, 16
          %s773 = scalar_lea.vmem [#allocation8], %s772
          %774 = dma.done %s770, 256
        $region56: #{tpu_custom_call.1} parent=51 // pred_fallthru
          _
      $region52: #{tpu_custom_call.1} parent=5 // pred_fallthru
        _
    $region6: #{tpu_custom_call.1} parent=1 // loop_footer
      %s20 = sadd.s32 1, %s16
    $region7: #{tpu_custom_call.1} parent=1 // loop_footer_branch
      %15 = sbr.rel target = $region3
    $region8: #{tpu_custom_call.1} parent=1 // loop_exit
      _
    %775 = vsyncpa [#allocation3], 1
    %s776 = scalar_lea.sflag [#allocation3], 1
    %777 = vsyncpa %s776, 1
    %778 = vsyncpa [#allocation6], 1
    %779 = vsyncpa [#allocation4], 1
    %s780 = scalar_lea.sflag [#allocation4], 1
    %781 = vsyncpa %s780, 1

</llo_original>
